<compile_context>
chip_gen: v7x
topology: tpu7x:2x2x1
jax: 0.10.0
libtpu: 0.0.40
codegen_flags: <defaults>
</compile_context>

<pallas_src>
import jax
import jax.numpy as jnp
from jax.experimental import pallas as pl
from jax.experimental.pallas import tpu as pltpu


def _round_up(x, m):
    return ((x + m - 1) // m) * m


def _largest_aligned_divisor(total, align, cap):
    """Largest multiple of `align` that divides `total` and is <= cap.

    `total` must already be a multiple of `align`.
    """
    q = total // align
    limit = max(1, cap // align)
    best = 1
    for m in range(1, min(q, limit) + 1):
        if q % m == 0:
            best = m
    return best * align


# ---------------------------------------------------------------------------
# Kernels
# ---------------------------------------------------------------------------
def _rs_single_pass_kernel(x_ref, w_ref, b_ref, o_ref):
    # Weight-resident fast path: one MXU pass, bias fused, no K loop, no scratch.
    # x_ref: (tm, Kp)  w_ref: (Kp, tn)  b_ref: (1, tn)  o_ref: (tm, tn)
    o_ref[...] = (
        jnp.dot(x_ref[...], w_ref[...], preferred_element_type=jnp.float32)
        + b_ref[...].astype(jnp.float32)
    ).astype(o_ref.dtype)


def _rs_tiled_kernel_f32out(x_ref, w_ref, b_ref, o_ref):
    # f32 output: accumulate directly into the resident output block
    # (its index_map ignores k), no separate accumulator scratch.
    k = pl.program_id(2)

    @pl.when(k == 0)
    def _():
        o_ref[...] = jnp.zeros_like(o_ref)

    o_ref[...] += jnp.dot(x_ref[...], w_ref[...], preferred_element_type=jnp.float32)

    @pl.when(k == pl.num_programs(2) - 1)
    def _():
        o_ref[...] += b_ref[...].astype(jnp.float32)


def _rs_tiled_kernel_acc(x_ref, w_ref, b_ref, o_ref, acc_ref):
    # Lower-precision output: keep an f32 VMEM accumulator across K.
    k = pl.program_id(2)

    @pl.when(k == 0)
    def _():
        acc_ref[...] = jnp.zeros_like(acc_ref)

    acc_ref[...] += jnp.dot(x_ref[...], w_ref[...], preferred_element_type=jnp.float32)

    @pl.when(k == pl.num_programs(2) - 1)
    def _():
        o_ref[...] = (acc_ref[...] + b_ref[...].astype(jnp.float32)).astype(o_ref.dtype)


# ---------------------------------------------------------------------------
# Parameter prep (one-time): transpose + pad hoisted out of the forward path
# ---------------------------------------------------------------------------
def init_reduce_state_params(weight, bias, *, cast_to_bf16=False):
    """weight: (H, 2H) PyTorch nn.Linear layout ; bias: (H,).

    Returns a dict with the pre-transposed, (8,128)-aligned zero-padded
    weight (Kp, Np), padded bias (1, Np), and original K/H for slicing.
    """
    H, two_h = weight.shape
    assert two_h == 2 * H, "Reduce_State expects weight of shape (H, 2H)"
    K = two_h
    Kp = _round_up(K, 128)
    Np = _round_up(H, 128)

    w_t = jnp.asarray(weight).T            # (K, H) — transpose once at init
    if cast_to_bf16:
        w_t = w_t.astype(jnp.bfloat16)     # numerics change; gated by flag
    b2d = jnp.asarray(bias).reshape(1, H)

    w_p = jnp.pad(w_t, ((0, Kp - K), (0, Np - H)))   # pad once at init
    b_p = jnp.pad(b2d, ((0, 0), (0, Np - H)))
    return {"w": w_p, "b": b_p, "K": K, "H": H}


# ---------------------------------------------------------------------------
# Forward
# ---------------------------------------------------------------------------
def reduce_state_forward(enc_hidden, params, *, weight_resident_bytes=8 << 20):
    """enc_hidden: (B, 2H).  Returns dec_hidden of shape (1, B, H)."""
    w_p, b_p = params["w"], params["b"]
    K, H = params["K"], params["H"]
    B, Kx = enc_hidden.shape
    assert Kx == K, f"enc_hidden last dim {Kx} != 2*hidden_size {K}"
    Kp, Np = w_p.shape

    out_dtype = enc_hidden.dtype
    x_isz = jnp.dtype(enc_hidden.dtype).itemsize
    w_isz = jnp.dtype(w_p.dtype).itemsize
    o_isz = jnp.dtype(out_dtype).itemsize

    # ---- M tiling (batch rows) --------------------------------------------
    Mp8 = _round_up(B, 8)
    tm = min(512, Mp8)
    Mp = _round_up(B, tm)                  # tm divides Mp by construction

    # Per-call padding only for the activation (weight/bias padded at init).
    x = enc_hidden
    if (Mp, Kp) != (B, K):
        x = jnp.pad(x, ((0, Mp - B), (0, Kp - K)))

    weight_resident = (Kp * Np * w_isz) <= weight_resident_bytes

    if weight_resident:
        # ---- Fast path: weight-resident, single MXU pass, 2-D parallel grid.
        tk = Kp
        # Split N into 2 blocks when possible so v7x's 2nd TensorCore has work
        # even when the M grid is a single step.  Each TC sees the full K
        # reduction, so no partial-sum plumbing is needed.
        tn = Np // 2 if (Np % 256 == 0) else Np
        grid = (Mp // tm, Np // tn)

        kernel = _rs_single_pass_kernel
        in_specs = [
            pl.BlockSpec((tm, tk), lambda i, j: (i, 0)),
            pl.BlockSpec((tk, tn), lambda i, j: (0, j)),
            pl.BlockSpec((1, tn), lambda i, j: (0, j)),
        ]
        out_specs = pl.BlockSpec((tm, tn), lambda i, j: (i, j))
        scratch_shapes = []
        dim_sem = ("parallel", "parallel")
        acc_bytes = 0
        n_steps, m_steps = Np // tn, Mp // tm
    else:
        # ---- Fallback: 3-D (M, N, K) tiled matmul, K last ("arbitrary").
        # tk/tn are 128-aligned divisors of the padded dims: no extra K
        # padding beyond 128 alignment is introduced (e.g. K=768 -> tk=768).
        tk = _largest_aligned_divisor(Kp, 128, 1024)
        tn = _largest_aligned_divisor(Np, 128, 256)
        grid = (Mp // tm, Np // tn, Kp // tk)

        if out_dtype == jnp.float32:
            kernel = _rs_tiled_kernel_f32out
            scratch_shapes = []
            acc_bytes = 0
        else:
            kernel = _rs_tiled_kernel_acc
            scratch_shapes = [pltpu.VMEM((tm, tn), jnp.float32)]
            acc_bytes = tm * tn * 4

        in_specs = [
            pl.BlockSpec((tm, tk), lambda i, j, k: (i, k)),
            pl.BlockSpec((tk, tn), lambda i, j, k: (k, j)),
            # Constant across K -> bias tile is not re-DMA'd per K step.
            pl.BlockSpec((1, tn), lambda i, j, k: (0, j)),
        ]
        out_specs = pl.BlockSpec((tm, tn), lambda i, j, k: (i, j))
        dim_sem = ("parallel", "parallel", "arbitrary")
        n_steps, m_steps = Np // tn, Mp // tm

    # ---- VMEM budget: double-buffered tiles (+ optional acc), headroom,
    # capped at 48 MiB (under v7x's 64 MiB physical; explicit raise above
    # v5e's 16 MiB scoped default).
    working = (
        2 * (tm * tk * x_isz + tk * tn * w_isz + tn * w_isz + tm * tn * o_isz)
        + acc_bytes
    )
    vmem_limit = min(max(int(working * 1.25), 16 << 20), 48 << 20)

    # ---- Cost estimate on padded shapes incl. per-tile re-reads (advisory).
    cost = pl.CostEstimate(
        flops=2 * Mp * Kp * Np,
        bytes_accessed=(
            x_isz * Mp * Kp * n_steps        # x re-read per N tile (upper bound)
            + w_isz * Kp * Np * m_steps      # w re-read per M tile
            + w_isz * Np                     # bias
            + o_isz * Mp * Np                # output
        ),
        transcendentals=0,
    )

    out = pl.pallas_call(
        kernel,
        out_shape=jax.ShapeDtypeStruct((Mp, Np), out_dtype),
        grid_spec=pltpu.PrefetchScalarGridSpec(
            num_scalar_prefetch=0,
            grid=grid,
            in_specs=in_specs,
            out_specs=out_specs,
            scratch_shapes=scratch_shapes,
        ),
        compiler_params=pltpu.CompilerParams(
            dimension_semantics=dim_sem,
            vmem_limit_bytes=vmem_limit,
        ),
        cost_estimate=cost,
    )(x, w_p, b_p)

    out = out[:B, :H]          # strip lane/sublane padding
    return out[None, :, :]     # unsqueeze(0) -> (1, B, H)


# ---------------------------------------------------------------------------
# Demo / correctness check
# ---------------------------------------------------------------------------
if __name__ == "__main__":
    hidden_size = 32
    batch = 2

    key = jax.random.PRNGKey(0)
    k_x, k_w, k_b = jax.random.split(key, 3)

    # Deterministic synthetic parameters (PyTorch Linear shapes: W (H, 2H), b (H,)).
    enc_hidden = jax.random.normal(k_x, (batch, 2 * hidden_size), dtype=jnp.float32)
    weight = jax.random.normal(k_w, (hidden_size, 2 * hidden_size), dtype=jnp.float32) * 0.1
    bias = jax.random.normal(k_b, (hidden_size,), dtype=jnp.float32) * 0.1

    # One-time parameter prep (transpose + padding hoisted out of forward).
    params = init_reduce_state_params(weight, bias)

    dec_hidden = reduce_state_forward(enc_hidden, params)
    dec_hidden = jax.block_until_ready(dec_hidden)

    # Reference check in plain JAX.
    ref = (enc_hidden @ weight.T + bias)[None, :, :]
    assert dec_hidden.shape == (1, batch, hidden_size)
    assert jnp.allclose(dec_hidden, ref, atol=1e-5, rtol=1e-5)

    print("KERNEL_OK")
</pallas_src>

<mosaic_0001>
module attributes {stable_mosaic.version = 11 : i64} {
  func.func @_rs_single_pass_kernel(%arg0: i32, %arg1: i32, %arg2: memref<8x128xf32, #tpu.memory_space<vmem>>, %arg3: memref<128x128xf32, #tpu.memory_space<vmem>>, %arg4: memref<1x128xf32, #tpu.memory_space<vmem>>, %arg5: memref<8x128xf32, #tpu.memory_space<vmem>>) attributes {dimension_semantics = [#tpu.dimension_semantics<parallel>, #tpu.dimension_semantics<parallel>], iteration_bounds = array<i64: 1, 1>, scalar_prefetch = 0 : i64, scratch_operands = 0 : i64, tpu.core_type = #tpu.core_type<tc>, window_params = [{transform_indices = @transform_0, window_bounds = array<i64: 8, 128>}, {transform_indices = @transform_1, window_bounds = array<i64: 128, 128>}, {transform_indices = @transform_2, window_bounds = array<i64: 1, 128>}, {transform_indices = @transform_3, window_bounds = array<i64: 8, 128>}]} {
    %c0 = arith.constant 0 : index
    %c0_0 = arith.constant 0 : index
    %0 = vector.load %arg2[%c0, %c0_0] : memref<8x128xf32, #tpu.memory_space<vmem>>, vector<8x128xf32>
    %c0_1 = arith.constant 0 : index
    %c0_2 = arith.constant 0 : index
    %1 = vector.load %arg3[%c0_1, %c0_2] : memref<128x128xf32, #tpu.memory_space<vmem>>, vector<128x128xf32>
    %cst = arith.constant dense<0.000000e+00> : vector<8x128xf32>
    %2 = tpu.matmul %0, %1, %cst {dimension_numbers = #tpu.dot_dimension_numbers<[1], [0], [0], [1], [0, 0, 1, 1], [], []>} : vector<8x128xf32>, vector<128x128xf32>, vector<8x128xf32> -> vector<8x128xf32>
    %c0_3 = arith.constant 0 : index
    %c0_4 = arith.constant 0 : index
    %3 = vector.load %arg4[%c0_3, %c0_4] : memref<1x128xf32, #tpu.memory_space<vmem>>, vector<1x128xf32>
    %4 = vector.broadcast %3 : vector<1x128xf32> to vector<8x128xf32>
    %5 = arith.addf %2, %4 : vector<8x128xf32>
    %c0_5 = arith.constant 0 : index
    %c0_6 = arith.constant 0 : index
    %6 = vector.load %arg5[%c0_5, %c0_6] : memref<8x128xf32, #tpu.memory_space<vmem>>, vector<8x128xf32>
    tpu.vector_store %arg5[%c0_5, %c0_6], %5 {strides = array<i32>} : memref<8x128xf32, #tpu.memory_space<vmem>>, vector<8x128xf32>,
    return
  }
  func.func @transform_0(%arg0: i32, %arg1: i32) -> (i32, i32) {
    %c0_i32 = arith.constant 0 : i32
    %c0_i32_0 = arith.constant 0 : i32
    return %arg0, %c0_i32 : i32, i32
  }
  func.func @transform_1(%arg0: i32, %arg1: i32) -> (i32, i32) {
    %c0_i32 = arith.constant 0 : i32
    %c0_i32_0 = arith.constant 0 : i32
    return %c0_i32, %arg1 : i32, i32
  }
  func.func @transform_2(%arg0: i32, %arg1: i32) -> (i32, i32) {
    %c0_i32 = arith.constant 0 : i32
    %c0_i32_0 = arith.constant 0 : i32
    return %c0_i32, %arg1 : i32, i32
  }
  func.func @transform_3(%arg0: i32, %arg1: i32) -> (i32, i32) {
    %c0_i32 = arith.constant 0 : i32
    return %arg0, %arg1 : i32, i32
  }
}

</mosaic_0001>

<llo_original>
// kernel: tpu_custom_call.1
$region0: #{tpu_custom_call.1}
  #allocation0 [shape = 'u32[]', space=smem, size = 0x4, offset = 0x4, fixed_abs, tag = 'smem constant byte address 0x4 - core index']
  #allocation1 [shape = 'u32[144,128]{1,0:T(1,128)}', space=vmem, size = 0x12000, scoped, tag = 'internal scratch']
  %s0 = inlined_call_operand.hbm [shape: f32[8,128], index: 0, kind: input, shape index: {}]
  %s1 = inlined_call_operand.hbm [shape: f32[128,128], index: 1, kind: input, shape index: {}]
  %s2 = inlined_call_operand.vmem [shape: f32[1,128], index: 2, kind: input, shape index: {}]
  %s3 = inlined_call_operand.hbm [shape: f32[8,128], index: 3, kind: output, shape index: {}]
  %s4 = sld [smem:[#allocation0]]
  $region30: #{tpu_custom_call.1} parent=0
    _
  %s6 = ssub.s32 1, %s4
  %s7 = scalar_select 0, %s6, %s4
  $region1: #{tpu_custom_call.1} parent=0
    #allocation2 [shape = 'u8[4096]{0}', space=vmem, size = 0x1000, scoped, tag = 'input window, operand 0, single buffered']
    #allocation3 [shape = 's32[1]{0}', space=sflag, size = 0x4, scoped, tag = 'scoped memory for tpu_custom_call.1']
    #allocation4 [shape = 's32[1]{0}', space=sflag, size = 0x4, scoped, tag = 'scoped memory for tpu_custom_call.1']
    #allocation5 [shape = 'u8[65536]{0}', space=vmem, size = 0x10000, scoped, tag = 'input window, operand 1, single buffered']
    #allocation6 [shape = 's32[1]{0}', space=sflag, size = 0x4, scoped, tag = 'scoped memory for tpu_custom_call.1']
    #allocation7 [shape = 'u8[4096]{0}', space=vmem, size = 0x1000, scoped, tag = 'output window, operand 0, single buffered']
    %8 = vsyncpa [#allocation3], 0
    %9 = vsyncpa [#allocation6], 0
    %10 = vsyncpa [#allocation4], 0
    // Predicated region
    $region2: #{tpu_custom_call.1} parent=1 // pred_check
      _
    $region3: #{tpu_custom_call.1} parent=1 // pred_check_branch
      %12 = sbr.rel (0) target = $region5
    $region4: #{tpu_custom_call.1} parent=1 // pred_region
      %s14 = ssub.s32 128, 128
      %15 = vsyncadd [#allocation3], %s14
      %s17 = sshll.u32 [#allocation2], 4
      %s18 = int_to_ptr.vmem [resolvable:$true] %s17
      %20 = dma.hbm_to_vmem [thread:$0]  %s0, 128, %s18, [#allocation3]
    $region5: #{tpu_custom_call.1} parent=1 // pred_fallthru
      _
    // Predicated region
    $region6: #{tpu_custom_call.1} parent=1 // pred_check
      _
    $region7: #{tpu_custom_call.1} parent=1 // pred_check_branch
      %22 = sbr.rel (0) target = $region9
    $region8: #{tpu_custom_call.1} parent=1 // pred_region
      %s24 = ssub.s32 2048, 2048
      %25 = vsyncadd [#allocation6], %s24
      %s26 = sshll.u32 [#allocation5], 4
      %s27 = int_to_ptr.vmem [resolvable:$true] %s26
      %32 = dma.hbm_to_vmem [thread:$0]  %s1, 2048, %s27, [#allocation6], 128, 128, 8
    $region9: #{tpu_custom_call.1} parent=1 // pred_fallthru
      _
    // Predicated region
    $region10: #{tpu_custom_call.1} parent=1 // pred_check
      _
    $region11: #{tpu_custom_call.1} parent=1 // pred_check_branch
      %34 = sbr.rel (0) target = $region13
    $region12: #{tpu_custom_call.1} parent=1 // pred_region
      _
    $region13: #{tpu_custom_call.1} parent=1 // pred_fallthru
      _
    // Predicated region
    $region14: #{tpu_custom_call.1} parent=1 // pred_check
      _
    $region15: #{tpu_custom_call.1} parent=1 // pred_check_branch
      %36 = sbr.rel (0) target = $region17
    $region16: #{tpu_custom_call.1} parent=1 // pred_region
      %37 = dma.done [#allocation3], 128
    $region17: #{tpu_custom_call.1} parent=1 // pred_fallthru
      _
    // Predicated region
    $region18: #{tpu_custom_call.1} parent=1 // pred_check
      _
    $region19: #{tpu_custom_call.1} parent=1 // pred_check_branch
      %39 = sbr.rel (0) target = $region21
    $region20: #{tpu_custom_call.1} parent=1 // pred_region
      %40 = dma.done [#allocation6], 2048
    $region21: #{tpu_custom_call.1} parent=1 // pred_fallthru
      _
    %v41 = vld [vmem:[#allocation2] sm:$0xff]
    %v42 = vld [vmem:[#allocation5] sm:$0xff]
    %v43 = vld [vmem:[#allocation5 + $0x8] sm:$0xff]
    %v44 = vld [vmem:[#allocation5 + $0x10] sm:$0xff]
    %v45 = vld [vmem:[#allocation5 + $0x18] sm:$0xff]
    %v46 = vld [vmem:[#allocation5 + $0x20] sm:$0xff]
    %v47 = vld [vmem:[#allocation5 + $0x28] sm:$0xff]
    %v48 = vld [vmem:[#allocation5 + $0x30] sm:$0xff]
    %v49 = vld [vmem:[#allocation5 + $0x38] sm:$0xff]
    %v50 = vld [vmem:[#allocation5 + $0x40] sm:$0xff]
    %v51 = vld [vmem:[#allocation5 + $0x48] sm:$0xff]
    %v52 = vld [vmem:[#allocation5 + $0x50] sm:$0xff]
    %v53 = vld [vmem:[#allocation5 + $0x58] sm:$0xff]
    %v54 = vld [vmem:[#allocation5 + $0x60] sm:$0xff]
    %v55 = vld [vmem:[#allocation5 + $0x68] sm:$0xff]
    %v56 = vld [vmem:[#allocation5 + $0x70] sm:$0xff]
    %v57 = vld [vmem:[#allocation5 + $0x78] sm:$0xff]
    %v58 = vld [vmem:[%s2] sm:$0x1]
    %v60 = vlaneseq
    %v61 = vshrl.u32 %v60, 7
    %v62 = vsub.s32 0, %v61
    %v63 = vrot.slane %v58, %v62
    %65 = vmatprep.subr.mxu0 0.0
    %66 = vmatpush1.msra.mxu0 %v42
    %67 = vmatprep.subr.mxu0 0.0
    %68 = vmatpush1.msra.mxu0 %v43
    %69 = vmatprep.subr.mxu0 0.0
    %70 = vmatpush1.msra.mxu0 %v44
    %71 = vmatprep.subr.mxu0 0.0
    %72 = vmatpush1.msra.mxu0 %v45
    %73 = vmatprep.subr.mxu0 0.0
    %74 = vmatpush1.msra.mxu0 %v46
    %75 = vmatprep.subr.mxu0 0.0
    %76 = vmatpush1.msra.mxu0 %v47
    %77 = vmatprep.subr.mxu0 0.0
    %78 = vmatpush1.msra.mxu0 %v48
    %79 = vmatprep.subr.mxu0 0.0
    %80 = vmatpush1.msra.mxu0 %v49
    %81 = vmatprep.subr.mxu0 0.0
    %82 = vmatpush1.msra.mxu0 %v50
    %83 = vmatprep.subr.mxu0 0.0
    %84 = vmatpush1.msra.mxu0 %v51
    %85 = vmatprep.subr.mxu0 0.0
    %86 = vmatpush1.msra.mxu0 %v52
    %87 = vmatprep.subr.mxu0 0.0
    %88 = vmatpush1.msra.mxu0 %v53
    %89 = vmatprep.subr.mxu0 0.0
    %90 = vmatpush1.msra.mxu0 %v54
    %91 = vmatprep.subr.mxu0 0.0
    %92 = vmatpush1.msra.mxu0 %v55
    %93 = vmatprep.subr.mxu0 0.0
    %94 = vmatpush1.msra.mxu0 %v56
    %95 = vmatprep.subr.mxu0 0.0
    %96 = vmatpush1.msra.mxu0 %v57
    %97 = vmatprep.subr.mxu0 0.0
    %98 = vmatpush1.msra.mxu0 0.0
    %99 = vmatprep.subr.mxu0 0.0
    %100 = vmatpush1.msra.mxu0 0.0
    %101 = vmatprep.subr.mxu0 0.0
    %102 = vmatpush1.msra.mxu0 0.0
    %103 = vmatprep.subr.mxu0 0.0
    %104 = vmatpush1.msra.mxu0 0.0
    %105 = vmatprep.subr.mxu0 0.0
    %106 = vmatpush1.msra.mxu0 0.0
    %107 = vmatprep.subr.mxu0 0.0
    %108 = vmatpush1.msra.mxu0 0.0
    %109 = vmatprep.subr.mxu0 0.0
    %110 = vmatpush1.msra.mxu0 0.0
    %111 = vmatprep.subr.mxu0 0.0
    %112 = vmatpush1.msra.mxu0 0.0
    %113 = vmatprep.subr.mxu0 0.0
    %114 = vmatpush1.msra.mxu0 0.0
    %115 = vmatprep.subr.mxu0 0.0
    %116 = vmatpush1.msra.mxu0 0.0
    %117 = vmatprep.subr.mxu0 0.0
    %118 = vmatpush1.msra.mxu0 0.0
    %119 = vmatprep.subr.mxu0 0.0
    %120 = vmatpush1.msra.mxu0 0.0
    %121 = vmatprep.subr.mxu0 0.0
    %122 = vmatpush1.msra.mxu0 0.0
    %123 = vmatprep.subr.mxu0 0.0
    %124 = vmatpush1.msra.mxu0 0.0
    %125 = vmatprep.subr.mxu0 0.0
    %126 = vmatpush1.msra.mxu0 0.0
    %127 = vmatprep.subr.mxu0 0.0
    %128 = vmatpush1.msra.mxu0 0.0
    %129 = vmatprep.mubr.f32.mxu0 0.0
    %130 = vmatmul.mubr.f32.gmra.mrb[0].mxu0 %v41
    %v131 = vpop.f32.mrb[0].mxu0
    %v132 = vadd.f32 %v63, %v131
    %v133 = vpop.f32.mrb[0].mxu0
    %134 = vdwg.mxu0
    %135 = vst [vmem:[#allocation7] sm:$0xff] %v132
    // Predicated region
    $region22: #{tpu_custom_call.1} parent=1 // pred_check
      _
    $region23: #{tpu_custom_call.1} parent=1 // pred_check_branch
      %137 = sbr.rel (0) target = $region25
    $region24: #{tpu_custom_call.1} parent=1 // pred_region
      %s139 = ssub.s32 128, 128
      %140 = vsyncadd [#allocation4], %s139
      %s142 = sshll.u32 [#allocation7], 4
      %s143 = int_to_ptr.vmem [resolvable:$true] %s142
      %145 = dma.vmem_to_hbm [thread:$0]  %s143, 128, %s3, [#allocation4]
    $region25: #{tpu_custom_call.1} parent=1 // pred_fallthru
      _
    // Predicated region
    $region26: #{tpu_custom_call.1} parent=1 // pred_check
      _
    $region27: #{tpu_custom_call.1} parent=1 // pred_check_branch
      %147 = sbr.rel (0) target = $region29
    $region28: #{tpu_custom_call.1} parent=1 // pred_region
      %148 = dma.done [#allocation4], 128
    $region29: #{tpu_custom_call.1} parent=1 // pred_fallthru
      _
    %149 = vsyncpa [#allocation3], 1
    %150 = vsyncpa [#allocation6], 1
    %151 = vsyncpa [#allocation4], 1

</llo_original>
